<compile_context>
chip_gen: v6e
topology: v6e:2x2x1
jax: 0.10.0
libtpu: 0.0.40
codegen_flags: <defaults>
</compile_context>

<pallas_src>
import functools

import jax
import jax.numpy as jnp
from jax import lax
from jax.experimental import pallas as pl
from jax.experimental.pallas import tpu as pltpu

LANE = 128
_SQRT_HALF = 0.7071067811865476


def _gelu_exact(x):
    # PyTorch nn.GELU() default: x * 0.5 * (1 + erf(x / sqrt(2)))
    return x * 0.5 * (1.0 + lax.erf(x * jnp.asarray(_SQRT_HALF, x.dtype)))


def mlp_kernel(
    x_ref,
    w1_ref, c1_ref,
    w2_ref, c2_ref,
    w3_ref, c3_ref,
    w4_ref, c4_ref,
    w5_ref, c5_ref,
    w6_ref, c6_ref,
    o_ref,
):
    # Activations enter the MXU as bf16; accumulation, bias and GELU stay f32.
    y = x_ref[...].astype(jnp.bfloat16)

    def fused_layer(y_bf16, w_ref, c_ref):
        h = jnp.dot(y_bf16, w_ref[...], preferred_element_type=jnp.float32)
        h = h + c_ref[...]  # folded Linear-bias + eval-mode BatchNorm
        return _gelu_exact(h).astype(jnp.bfloat16)

    y = fused_layer(y, w1_ref, c1_ref)
    y = fused_layer(y, w2_ref, c2_ref)
    y = fused_layer(y, w3_ref, c3_ref)
    y = fused_layer(y, w4_ref, c4_ref)
    y = fused_layer(y, w5_ref, c5_ref)

    out = jnp.dot(y, w6_ref[...], preferred_element_type=jnp.float32) + c6_ref[...]
    o_ref[...] = out.astype(o_ref.dtype)


def init_raw_params(key, input_size, hidden, output_size, dtype=jnp.float32):
    """Deterministic PyTorch-like parameter init (weights stored as (in, out))."""
    sizes = [(input_size, hidden)] + [(hidden, hidden)] * 4 + [(hidden, output_size)]
    params = {}
    for i, (fin, fout) in enumerate(sizes, start=1):
        key, kw, kb = jax.random.split(key, 3)
        bound = 1.0 / float(fin) ** 0.5
        params[f"w{i}"] = jax.random.uniform(kw, (fin, fout), dtype, -bound, bound)
        params[f"b{i}"] = jax.random.uniform(kb, (1, fout), dtype, -bound, bound)
    # BatchNorm1d affine params / running stats for bn1..bn5, pre-reduced to
    # per-feature scale/shift (eval mode).
    eps = 1e-5
    for i in range(1, 6):
        key, kg, kbeta, km, kv = jax.random.split(key, 5)
        gamma = 1.0 + 0.1 * jax.random.normal(kg, (1, hidden), dtype)
        beta = 0.1 * jax.random.normal(kbeta, (1, hidden), dtype)
        rmean = 0.05 * jax.random.normal(km, (1, hidden), dtype)
        rvar = 1.0 + 0.1 * jax.random.uniform(kv, (1, hidden), dtype)
        scale = gamma / jnp.sqrt(rvar + eps)
        shift = beta - rmean * scale
        params[f"s{i}"] = scale
        params[f"t{i}"] = shift
    return params


def fold_params(params, output_size):
    """Fold eval-mode BN into the preceding Linear (bf16 weights, f32 bias) and
    pad the final layer to a lane-dense (multiple-of-128) output slab."""
    fused = {}
    for i in range(1, 6):
        s = params[f"s{i}"]
        fused[f"w{i}"] = (params[f"w{i}"] * s).astype(jnp.bfloat16)
        fused[f"c{i}"] = (params[f"b{i}"] * s + params[f"t{i}"]).astype(jnp.float32)
    n_pad = (-output_size) % LANE
    fused["w6"] = jnp.pad(params["w6"], ((0, 0), (0, n_pad))).astype(jnp.bfloat16)
    fused["c6"] = jnp.pad(params["b6"], ((0, 0), (0, n_pad))).astype(jnp.float32)
    return fused


@functools.partial(jax.jit, static_argnames=("output_size",))
def mlp_forward(x, fused, *, output_size):
    B = x.shape[0]
    # einops.rearrange(x, 'b c h w -> b (c h w)')  -- glue, stays in plain JAX.
    x_flat = x.reshape(B, -1)
    padded_out = fused["w6"].shape[1]

    operands = [x_flat]
    in_specs = [pl.BlockSpec(x_flat.shape, lambda: (0, 0), memory_space=pltpu.VMEM)]
    for i in range(1, 7):
        for name in (f"w{i}", f"c{i}"):
            p = fused[name]
            operands.append(p)
            in_specs.append(
                pl.BlockSpec(p.shape, lambda: (0, 0), memory_space=pltpu.VMEM)
            )

    out = pl.pallas_call(
        mlp_kernel,
        out_shape=jax.ShapeDtypeStruct((B, padded_out), jnp.float32),
        in_specs=in_specs,
        out_specs=pl.BlockSpec(
            (B, padded_out), lambda: (0, 0), memory_space=pltpu.VMEM
        ),
    )(*operands)
    # Strip the lane-padding back to the true output width (cheap XLA slice).
    return out[:, :output_size]


def mlp_reference(x, params):
    """Pure-JAX f32 reference of the same eval-mode forward (unfolded params)."""
    y = x.reshape(x.shape[0], -1)
    for i in range(1, 6):
        y = y @ params[f"w{i}"] + params[f"b{i}"]
        y = y * params[f"s{i}"] + params[f"t{i}"]
        y = _gelu_exact(y)
    return y @ params["w6"] + params["b6"]


if __name__ == "__main__":
    # Small shapes consistent with the module: x is (B, C, H, W) NCHW.
    B, C, H, W = 8, 4, 16, 16
    input_size = C * H * W          # 1024
    hidden_sizes = 128
    output_size = 64
    # dropout_rate is irrelevant in eval mode (identity).

    key = jax.random.PRNGKey(0)
    kx, kp = jax.random.split(key)
    x = jax.random.normal(kx, (B, C, H, W), jnp.float32)

    raw_params = init_raw_params(kp, input_size, hidden_sizes, output_size)
    fused_params = fold_params(raw_params, output_size)

    out = mlp_forward(x, fused_params, output_size=output_size)
    out = jax.block_until_ready(out)

    ref = mlp_reference(x, raw_params)
    assert out.shape == (B, output_size), out.shape
    # bf16 MXU inputs (f32 accumulation) vs. pure-f32 reference -> looser tol.
    assert jnp.allclose(out, ref, atol=5e-2, rtol=5e-2), float(
        jnp.max(jnp.abs(out - ref))
    )
    print("KERNEL_OK")
</pallas_src>

<mosaic_0001>
module attributes {stable_mosaic.version = 11 : i64} {
  func.func @mlp_kernel(%arg0: memref<8x1024xf32, #tpu.memory_space<vmem>>, %arg1: memref<1024x128xbf16, #tpu.memory_space<vmem>>, %arg2: memref<1x128xf32, #tpu.memory_space<vmem>>, %arg3: memref<128x128xbf16, #tpu.memory_space<vmem>>, %arg4: memref<1x128xf32, #tpu.memory_space<vmem>>, %arg5: memref<128x128xbf16, #tpu.memory_space<vmem>>, %arg6: memref<1x128xf32, #tpu.memory_space<vmem>>, %arg7: memref<128x128xbf16, #tpu.memory_space<vmem>>, %arg8: memref<1x128xf32, #tpu.memory_space<vmem>>, %arg9: memref<128x128xbf16, #tpu.memory_space<vmem>>, %arg10: memref<1x128xf32, #tpu.memory_space<vmem>>, %arg11: memref<128x128xbf16, #tpu.memory_space<vmem>>, %arg12: memref<1x128xf32, #tpu.memory_space<vmem>>, %arg13: memref<8x128xf32, #tpu.memory_space<vmem>>) attributes {dimension_semantics = [], scalar_prefetch = 0 : i64, scratch_operands = 0 : i64, tpu.core_type = #tpu.core_type<tc>} {
    %c0 = arith.constant 0 : index
    %c0_0 = arith.constant 0 : index
    %0 = vector.load %arg0[%c0, %c0_0] : memref<8x1024xf32, #tpu.memory_space<vmem>>, vector<8x1024xf32>
    %1 = arith.truncf %0 : vector<8x1024xf32> to vector<8x1024xbf16>
    %c0_1 = arith.constant 0 : index
    %c0_2 = arith.constant 0 : index
    %2 = vector.load %arg1[%c0_1, %c0_2] : memref<1024x128xbf16, #tpu.memory_space<vmem>>, vector<1024x128xbf16>
    %cst = arith.constant dense<0.000000e+00> : vector<8x128xf32>
    %3 = tpu.matmul %1, %2, %cst {dimension_numbers = #tpu.dot_dimension_numbers<[1], [0], [0], [1], [0, 0, 1, 1], [], []>} : vector<8x1024xbf16>, vector<1024x128xbf16>, vector<8x128xf32> -> vector<8x128xf32>
    %c0_3 = arith.constant 0 : index
    %c0_4 = arith.constant 0 : index
    %4 = vector.load %arg2[%c0_3, %c0_4] : memref<1x128xf32, #tpu.memory_space<vmem>>, vector<1x128xf32>
    %5 = vector.broadcast %4 : vector<1x128xf32> to vector<8x128xf32>
    %6 = arith.addf %3, %5 : vector<8x128xf32>
    %cst_5 = arith.constant 5.000000e-01 : f32
    %7 = vector.broadcast %cst_5 : f32 to vector<8x128xf32>
    %8 = arith.mulf %6, %7 : vector<8x128xf32>
    %cst_6 = arith.constant 0.707106769 : f32
    %9 = vector.broadcast %cst_6 : f32 to vector<8x128xf32>
    %10 = arith.mulf %6, %9 : vector<8x128xf32>
    %11 = math.erf %10 : vector<8x128xf32>
    %cst_7 = arith.constant 1.000000e+00 : f32
    %12 = vector.broadcast %cst_7 : f32 to vector<8x128xf32>
    %13 = arith.addf %12, %11 : vector<8x128xf32>
    %14 = arith.mulf %8, %13 : vector<8x128xf32>
    %15 = arith.truncf %14 : vector<8x128xf32> to vector<8x128xbf16>
    %c0_8 = arith.constant 0 : index
    %c0_9 = arith.constant 0 : index
    %16 = vector.load %arg3[%c0_8, %c0_9] : memref<128x128xbf16, #tpu.memory_space<vmem>>, vector<128x128xbf16>
    %cst_10 = arith.constant dense<0.000000e+00> : vector<8x128xf32>
    %17 = tpu.matmul %15, %16, %cst_10 {dimension_numbers = #tpu.dot_dimension_numbers<[1], [0], [0], [1], [0, 0, 1, 1], [], []>} : vector<8x128xbf16>, vector<128x128xbf16>, vector<8x128xf32> -> vector<8x128xf32>
    %c0_11 = arith.constant 0 : index
    %c0_12 = arith.constant 0 : index
    %18 = vector.load %arg4[%c0_11, %c0_12] : memref<1x128xf32, #tpu.memory_space<vmem>>, vector<1x128xf32>
    %19 = vector.broadcast %18 : vector<1x128xf32> to vector<8x128xf32>
    %20 = arith.addf %17, %19 : vector<8x128xf32>
    %cst_13 = arith.constant 5.000000e-01 : f32
    %21 = vector.broadcast %cst_13 : f32 to vector<8x128xf32>
    %22 = arith.mulf %20, %21 : vector<8x128xf32>
    %cst_14 = arith.constant 0.707106769 : f32
    %23 = vector.broadcast %cst_14 : f32 to vector<8x128xf32>
    %24 = arith.mulf %20, %23 : vector<8x128xf32>
    %25 = math.erf %24 : vector<8x128xf32>
    %cst_15 = arith.constant 1.000000e+00 : f32
    %26 = vector.broadcast %cst_15 : f32 to vector<8x128xf32>
    %27 = arith.addf %26, %25 : vector<8x128xf32>
    %28 = arith.mulf %22, %27 : vector<8x128xf32>
    %29 = arith.truncf %28 : vector<8x128xf32> to vector<8x128xbf16>
    %c0_16 = arith.constant 0 : index
    %c0_17 = arith.constant 0 : index
    %30 = vector.load %arg5[%c0_16, %c0_17] : memref<128x128xbf16, #tpu.memory_space<vmem>>, vector<128x128xbf16>
    %cst_18 = arith.constant dense<0.000000e+00> : vector<8x128xf32>
    %31 = tpu.matmul %29, %30, %cst_18 {dimension_numbers = #tpu.dot_dimension_numbers<[1], [0], [0], [1], [0, 0, 1, 1], [], []>} : vector<8x128xbf16>, vector<128x128xbf16>, vector<8x128xf32> -> vector<8x128xf32>
    %c0_19 = arith.constant 0 : index
    %c0_20 = arith.constant 0 : index
    %32 = vector.load %arg6[%c0_19, %c0_20] : memref<1x128xf32, #tpu.memory_space<vmem>>, vector<1x128xf32>
    %33 = vector.broadcast %32 : vector<1x128xf32> to vector<8x128xf32>
    %34 = arith.addf %31, %33 : vector<8x128xf32>
    %cst_21 = arith.constant 5.000000e-01 : f32
    %35 = vector.broadcast %cst_21 : f32 to vector<8x128xf32>
    %36 = arith.mulf %34, %35 : vector<8x128xf32>
    %cst_22 = arith.constant 0.707106769 : f32
    %37 = vector.broadcast %cst_22 : f32 to vector<8x128xf32>
    %38 = arith.mulf %34, %37 : vector<8x128xf32>
    %39 = math.erf %38 : vector<8x128xf32>
    %cst_23 = arith.constant 1.000000e+00 : f32
    %40 = vector.broadcast %cst_23 : f32 to vector<8x128xf32>
    %41 = arith.addf %40, %39 : vector<8x128xf32>
    %42 = arith.mulf %36, %41 : vector<8x128xf32>
    %43 = arith.truncf %42 : vector<8x128xf32> to vector<8x128xbf16>
    %c0_24 = arith.constant 0 : index
    %c0_25 = arith.constant 0 : index
    %44 = vector.load %arg7[%c0_24, %c0_25] : memref<128x128xbf16, #tpu.memory_space<vmem>>, vector<128x128xbf16>
    %cst_26 = arith.constant dense<0.000000e+00> : vector<8x128xf32>
    %45 = tpu.matmul %43, %44, %cst_26 {dimension_numbers = #tpu.dot_dimension_numbers<[1], [0], [0], [1], [0, 0, 1, 1], [], []>} : vector<8x128xbf16>, vector<128x128xbf16>, vector<8x128xf32> -> vector<8x128xf32>
    %c0_27 = arith.constant 0 : index
    %c0_28 = arith.constant 0 : index
    %46 = vector.load %arg8[%c0_27, %c0_28] : memref<1x128xf32, #tpu.memory_space<vmem>>, vector<1x128xf32>
    %47 = vector.broadcast %46 : vector<1x128xf32> to vector<8x128xf32>
    %48 = arith.addf %45, %47 : vector<8x128xf32>
    %cst_29 = arith.constant 5.000000e-01 : f32
    %49 = vector.broadcast %cst_29 : f32 to vector<8x128xf32>
    %50 = arith.mulf %48, %49 : vector<8x128xf32>
    %cst_30 = arith.constant 0.707106769 : f32
    %51 = vector.broadcast %cst_30 : f32 to vector<8x128xf32>
    %52 = arith.mulf %48, %51 : vector<8x128xf32>
    %53 = math.erf %52 : vector<8x128xf32>
    %cst_31 = arith.constant 1.000000e+00 : f32
    %54 = vector.broadcast %cst_31 : f32 to vector<8x128xf32>
    %55 = arith.addf %54, %53 : vector<8x128xf32>
    %56 = arith.mulf %50, %55 : vector<8x128xf32>
    %57 = arith.truncf %56 : vector<8x128xf32> to vector<8x128xbf16>
    %c0_32 = arith.constant 0 : index
    %c0_33 = arith.constant 0 : index
    %58 = vector.load %arg9[%c0_32, %c0_33] : memref<128x128xbf16, #tpu.memory_space<vmem>>, vector<128x128xbf16>
    %cst_34 = arith.constant dense<0.000000e+00> : vector<8x128xf32>
    %59 = tpu.matmul %57, %58, %cst_34 {dimension_numbers = #tpu.dot_dimension_numbers<[1], [0], [0], [1], [0, 0, 1, 1], [], []>} : vector<8x128xbf16>, vector<128x128xbf16>, vector<8x128xf32> -> vector<8x128xf32>
    %c0_35 = arith.constant 0 : index
    %c0_36 = arith.constant 0 : index
    %60 = vector.load %arg10[%c0_35, %c0_36] : memref<1x128xf32, #tpu.memory_space<vmem>>, vector<1x128xf32>
    %61 = vector.broadcast %60 : vector<1x128xf32> to vector<8x128xf32>
    %62 = arith.addf %59, %61 : vector<8x128xf32>
    %cst_37 = arith.constant 5.000000e-01 : f32
    %63 = vector.broadcast %cst_37 : f32 to vector<8x128xf32>
    %64 = arith.mulf %62, %63 : vector<8x128xf32>
    %cst_38 = arith.constant 0.707106769 : f32
    %65 = vector.broadcast %cst_38 : f32 to vector<8x128xf32>
    %66 = arith.mulf %62, %65 : vector<8x128xf32>
    %67 = math.erf %66 : vector<8x128xf32>
    %cst_39 = arith.constant 1.000000e+00 : f32
    %68 = vector.broadcast %cst_39 : f32 to vector<8x128xf32>
    %69 = arith.addf %68, %67 : vector<8x128xf32>
    %70 = arith.mulf %64, %69 : vector<8x128xf32>
    %71 = arith.truncf %70 : vector<8x128xf32> to vector<8x128xbf16>
    %c0_40 = arith.constant 0 : index
    %c0_41 = arith.constant 0 : index
    %72 = vector.load %arg11[%c0_40, %c0_41] : memref<128x128xbf16, #tpu.memory_space<vmem>>, vector<128x128xbf16>
    %cst_42 = arith.constant dense<0.000000e+00> : vector<8x128xf32>
    %73 = tpu.matmul %71, %72, %cst_42 {dimension_numbers = #tpu.dot_dimension_numbers<[1], [0], [0], [1], [0, 0, 1, 1], [], []>} : vector<8x128xbf16>, vector<128x128xbf16>, vector<8x128xf32> -> vector<8x128xf32>
    %c0_43 = arith.constant 0 : index
    %c0_44 = arith.constant 0 : index
    %74 = vector.load %arg12[%c0_43, %c0_44] : memref<1x128xf32, #tpu.memory_space<vmem>>, vector<1x128xf32>
    %75 = vector.broadcast %74 : vector<1x128xf32> to vector<8x128xf32>
    %76 = arith.addf %73, %75 : vector<8x128xf32>
    %c0_45 = arith.constant 0 : index
    %c0_46 = arith.constant 0 : index
    %77 = vector.load %arg13[%c0_45, %c0_46] : memref<8x128xf32, #tpu.memory_space<vmem>>, vector<8x128xf32>
    tpu.vector_store %arg13[%c0_45, %c0_46], %76 {strides = array<i32>} : memref<8x128xf32, #tpu.memory_space<vmem>>, vector<8x128xf32>,
    return
  }
}

</mosaic_0001>

<llo_original>
// kernel: mlp_forward.1
$region0: #{mlp_forward.1}
  #allocation0 [shape = 'u32[]', space=smem, size = 0x4, offset = 0x4, fixed_abs, tag = 'smem constant byte address 0x4 - core index']
  #allocation1 [shape = 'u32[144,128]{1,0:T(1,128)}', space=vmem, size = 0x12000, scoped, tag = 'internal scratch']
  %s0 = inlined_call_operand.vmem [shape: f32[8,1024], index: 0, kind: input, shape index: {}]
  %s1 = inlined_call_operand.vmem [shape: bf16[1024,128], index: 1, kind: input, shape index: {}]
  %s2 = inlined_call_operand.vmem [shape: f32[1,128], index: 2, kind: input, shape index: {}]
  %s3 = inlined_call_operand.vmem [shape: bf16[128,128], index: 3, kind: input, shape index: {}]
  %s4 = inlined_call_operand.vmem [shape: f32[1,128], index: 4, kind: input, shape index: {}]
  %s5 = inlined_call_operand.hbm [shape: bf16[128,128], index: 5, kind: input, shape index: {}]
  %s6 = inlined_call_operand.vmem [shape: f32[1,128], index: 6, kind: input, shape index: {}]
  %s7 = inlined_call_operand.hbm [shape: bf16[128,128], index: 7, kind: input, shape index: {}]
  %s8 = inlined_call_operand.vmem [shape: f32[1,128], index: 8, kind: input, shape index: {}]
  %s9 = inlined_call_operand.hbm [shape: bf16[128,128], index: 9, kind: input, shape index: {}]
  %s10 = inlined_call_operand.vmem [shape: f32[1,128], index: 10, kind: input, shape index: {}]
  %s11 = inlined_call_operand.hbm [shape: bf16[128,128], index: 11, kind: input, shape index: {}]
  %s12 = inlined_call_operand.vmem [shape: f32[1,128], index: 12, kind: input, shape index: {}]
  %s13 = inlined_call_operand.hbm [shape: f32[8,128], index: 13, kind: output, shape index: {}]
  %s14 = sld [smem:[#allocation0]]
  $region78: #{mlp_forward.1} parent=0
    _
  %s16 = ssub.s32 1, %s14
  %s17 = scalar_select 0, %s16, %s14
  $region1: #{mlp_forward.1} parent=0
    #allocation2 [shape = 'u8[32768]{0}', space=vmem, size = 0x8000, scoped, tag = 'input window, operand 5, single buffered']
    #allocation3 [shape = 's32[1]{0}', space=sflag, size = 0x4, scoped, tag = 'scoped memory for mlp_forward.1']
    #allocation4 [shape = 's32[1]{0}', space=sflag, size = 0x4, scoped, tag = 'scoped memory for mlp_forward.1']
    #allocation5 [shape = 'u8[32768]{0}', space=vmem, size = 0x8000, scoped, tag = 'input window, operand 7, single buffered']
    #allocation6 [shape = 's32[1]{0}', space=sflag, size = 0x4, scoped, tag = 'scoped memory for mlp_forward.1']
    #allocation7 [shape = 'u8[32768]{0}', space=vmem, size = 0x8000, scoped, tag = 'input window, operand 9, single buffered']
    #allocation8 [shape = 'u8[32768]{0}', space=vmem, size = 0x8000, scoped, tag = 'input window, operand 11, single buffered']
    #allocation9 [shape = 's32[1]{0}', space=sflag, size = 0x4, scoped, tag = 'scoped memory for mlp_forward.1']
    #allocation10 [shape = 'u8[4096]{0}', space=vmem, size = 0x1000, scoped, tag = 'output window, operand 0, single buffered']
    %18 = vsyncpa [#allocation3], 0
    %19 = vsyncpa [#allocation6], 0
    %20 = vsyncpa [#allocation9], 0
    %21 = vsyncpa [#allocation4], 0
    // Predicated region
    $region2: #{mlp_forward.1} parent=1 // pred_check
      _
    $region3: #{mlp_forward.1} parent=1 // pred_check_branch
      %23 = sbr.rel (0) target = $region5
    $region4: #{mlp_forward.1} parent=1 // pred_region
      _
    $region5: #{mlp_forward.1} parent=1 // pred_fallthru
      _
    // Predicated region
    $region6: #{mlp_forward.1} parent=1 // pred_check
      _
    $region7: #{mlp_forward.1} parent=1 // pred_check_branch
      %25 = sbr.rel (0) target = $region9
    $region8: #{mlp_forward.1} parent=1 // pred_region
      _
    $region9: #{mlp_forward.1} parent=1 // pred_fallthru
      _
    // Predicated region
    $region10: #{mlp_forward.1} parent=1 // pred_check
      _
    $region11: #{mlp_forward.1} parent=1 // pred_check_branch
      %27 = sbr.rel (0) target = $region13
    $region12: #{mlp_forward.1} parent=1 // pred_region
      _
    $region13: #{mlp_forward.1} parent=1 // pred_fallthru
      _
    // Predicated region
    $region14: #{mlp_forward.1} parent=1 // pred_check
      _
    $region15: #{mlp_forward.1} parent=1 // pred_check_branch
      %29 = sbr.rel (0) target = $region17
    $region16: #{mlp_forward.1} parent=1 // pred_region
      _
    $region17: #{mlp_forward.1} parent=1 // pred_fallthru
      _
    // Predicated region
    $region18: #{mlp_forward.1} parent=1 // pred_check
      _
    $region19: #{mlp_forward.1} parent=1 // pred_check_branch
      %31 = sbr.rel (0) target = $region21
    $region20: #{mlp_forward.1} parent=1 // pred_region
      _
    $region21: #{mlp_forward.1} parent=1 // pred_fallthru
      _
    // Predicated region
    $region22: #{mlp_forward.1} parent=1 // pred_check
      _
    $region23: #{mlp_forward.1} parent=1 // pred_check_branch
      %33 = sbr.rel (0) target = $region25
    $region24: #{mlp_forward.1} parent=1 // pred_region
      %s35 = ssub.s32 1024, 1024
      %36 = vsyncadd [#allocation3], %s35
      %s37 = sshll.u32 [#allocation2], 4
      %s38 = int_to_ptr.vmem [resolvable:$true] %s37
      %43 = dma.hbm_to_vmem [thread:$0]  %s5, 1024, %s38, [#allocation3], 64, 64, 4
    $region25: #{mlp_forward.1} parent=1 // pred_fallthru
      _
    // Predicated region
    $region26: #{mlp_forward.1} parent=1 // pred_check
      _
    $region27: #{mlp_forward.1} parent=1 // pred_check_branch
      %45 = sbr.rel (0) target = $region29
    $region28: #{mlp_forward.1} parent=1 // pred_region
      _
    $region29: #{mlp_forward.1} parent=1 // pred_fallthru
      _
    // Predicated region
    $region30: #{mlp_forward.1} parent=1 // pred_check
      _
    $region31: #{mlp_forward.1} parent=1 // pred_check_branch
      %47 = sbr.rel (0) target = $region33
    $region32: #{mlp_forward.1} parent=1 // pred_region
      %s49 = ssub.s32 1024, 1024
      %50 = vsyncadd [#allocation6], %s49
      %s51 = sshll.u32 [#allocation5], 4
      %s52 = int_to_ptr.vmem [resolvable:$true] %s51
      %57 = dma.hbm_to_vmem [thread:$0]  %s7, 1024, %s52, [#allocation6], 64, 64, 4
    $region33: #{mlp_forward.1} parent=1 // pred_fallthru
      _
    // Predicated region
    $region34: #{mlp_forward.1} parent=1 // pred_check
      _
    $region35: #{mlp_forward.1} parent=1 // pred_check_branch
      %59 = sbr.rel (0) target = $region37
    $region36: #{mlp_forward.1} parent=1 // pred_region
      _
    $region37: #{mlp_forward.1} parent=1 // pred_fallthru
      _
    // Predicated region
    $region38: #{mlp_forward.1} parent=1 // pred_check
      _
    $region39: #{mlp_forward.1} parent=1 // pred_check_branch
      %61 = sbr.rel (0) target = $region41
    $region40: #{mlp_forward.1} parent=1 // pred_region
      %s63 = ssub.s32 1024, 1024
      %64 = vsyncadd [#allocation6], %s63
      %s65 = sshll.u32 [#allocation7], 4
      %s66 = int_to_ptr.vmem [resolvable:$true] %s65
      %71 = dma.hbm_to_vmem [thread:$0]  %s9, 1024, %s66, [#allocation6], 64, 64, 4
    $region41: #{mlp_forward.1} parent=1 // pred_fallthru
      _
    // Predicated region
    $region42: #{mlp_forward.1} parent=1 // pred_check
      _
    $region43: #{mlp_forward.1} parent=1 // pred_check_branch
      %73 = sbr.rel (0) target = $region45
    $region44: #{mlp_forward.1} parent=1 // pred_region
      _
    $region45: #{mlp_forward.1} parent=1 // pred_fallthru
      _
    // Predicated region
    $region46: #{mlp_forward.1} parent=1 // pred_check
      _
    $region47: #{mlp_forward.1} parent=1 // pred_check_branch
      %75 = sbr.rel (0) target = $region49
    $region48: #{mlp_forward.1} parent=1 // pred_region
      %s77 = ssub.s32 1024, 1024
      %78 = vsyncadd [#allocation9], %s77
      %s79 = sshll.u32 [#allocation8], 4
      %s80 = int_to_ptr.vmem [resolvable:$true] %s79
      %85 = dma.hbm_to_vmem [thread:$0]  %s11, 1024, %s80, [#allocation9], 64, 64, 4
    $region49: #{mlp_forward.1} parent=1 // pred_fallthru
      _
    // Predicated region
    $region50: #{mlp_forward.1} parent=1 // pred_check
      _
    $region51: #{mlp_forward.1} parent=1 // pred_check_branch
      %87 = sbr.rel (0) target = $region53
    $region52: #{mlp_forward.1} parent=1 // pred_region
      _
    $region53: #{mlp_forward.1} parent=1 // pred_fallthru
      _
    // Predicated region
    $region54: #{mlp_forward.1} parent=1 // pred_check
      _
    $region55: #{mlp_forward.1} parent=1 // pred_check_branch
      %89 = sbr.rel (0) target = $region57
    $region56: #{mlp_forward.1} parent=1 // pred_region
      %90 = dma.done [#allocation3], 1024
    $region57: #{mlp_forward.1} parent=1 // pred_fallthru
      _
    // Predicated region
    $region58: #{mlp_forward.1} parent=1 // pred_check
      _
    $region59: #{mlp_forward.1} parent=1 // pred_check_branch
      %92 = sbr.rel (0) target = $region61
    $region60: #{mlp_forward.1} parent=1 // pred_region
      %93 = dma.done [#allocation6], 1024
    $region61: #{mlp_forward.1} parent=1 // pred_fallthru
      _
    // Predicated region
    $region62: #{mlp_forward.1} parent=1 // pred_check
      _
    $region63: #{mlp_forward.1} parent=1 // pred_check_branch
      %95 = sbr.rel (0) target = $region65
    $region64: #{mlp_forward.1} parent=1 // pred_region
      %96 = dma.done [#allocation6], 1024
    $region65: #{mlp_forward.1} parent=1 // pred_fallthru
      _
    // Predicated region
    $region66: #{mlp_forward.1} parent=1 // pred_check
      _
    $region67: #{mlp_forward.1} parent=1 // pred_check_branch
      %98 = sbr.rel (0) target = $region69
    $region68: #{mlp_forward.1} parent=1 // pred_region
      %99 = dma.done [#allocation9], 1024
    $region69: #{mlp_forward.1} parent=1 // pred_fallthru
      _
    %v101 = vld [vmem:[%s0] sm:$0xff]
    %v102 = vld [vmem:[%s0 + $0x8] sm:$0xff]
    %v103 = vld [vmem:[%s0 + $0x10] sm:$0xff]
    %v104 = vld [vmem:[%s0 + $0x18] sm:$0xff]
    %v105 = vld [vmem:[%s0 + $0x20] sm:$0xff]
    %v106 = vld [vmem:[%s0 + $0x28] sm:$0xff]
    %v107 = vld [vmem:[%s0 + $0x30] sm:$0xff]
    %v108 = vld [vmem:[%s0 + $0x38] sm:$0xff]
    %v109 = vpack.c.bf16 %v101, %v101
    %v110 = vpack.c.bf16 %v102, %v102
    %v111 = vpack.c.bf16 %v103, %v103
    %v112 = vpack.c.bf16 %v104, %v104
    %v113 = vpack.c.bf16 %v105, %v105
    %v114 = vpack.c.bf16 %v106, %v106
    %v115 = vpack.c.bf16 %v107, %v107
    %v116 = vpack.c.bf16 %v108, %v108
    %v117 = vld [vmem:[%s1] sm:$0xf]
    %v118 = vld [vmem:[%s1 + $0x4] sm:$0xf]
    %v119 = vld [vmem:[%s1 + $0x8] sm:$0xf]
    %v120 = vld [vmem:[%s1 + $0xc] sm:$0xf]
    %v121 = vld [vmem:[%s1 + $0x10] sm:$0xf]
    %v122 = vld [vmem:[%s1 + $0x14] sm:$0xf]
    %v123 = vld [vmem:[%s1 + $0x18] sm:$0xf]
    %v124 = vld [vmem:[%s1 + $0x1c] sm:$0xf]
    %v125 = vld [vmem:[%s1 + $0x20] sm:$0xf]
    %v126 = vld [vmem:[%s1 + $0x24] sm:$0xf]
    %v127 = vld [vmem:[%s1 + $0x28] sm:$0xf]
    %v128 = vld [vmem:[%s1 + $0x2c] sm:$0xf]
    %v129 = vld [vmem:[%s1 + $0x30] sm:$0xf]
    %v130 = vld [vmem:[%s1 + $0x34] sm:$0xf]
    %v131 = vld [vmem:[%s1 + $0x38] sm:$0xf]
    %v132 = vld [vmem:[%s1 + $0x3c] sm:$0xf]
    %v133 = vld [vmem:[%s1 + $0x40] sm:$0xf]
    %v134 = vld [vmem:[%s1 + $0x44] sm:$0xf]
    %v135 = vld [vmem:[%s1 + $0x48] sm:$0xf]
    %v136 = vld [vmem:[%s1 + $0x4c] sm:$0xf]
    %v137 = vld [vmem:[%s1 + $0x50] sm:$0xf]
    %v138 = vld [vmem:[%s1 + $0x54] sm:$0xf]
    %v139 = vld [vmem:[%s1 + $0x58] sm:$0xf]
    %v140 = vld [vmem:[%s1 + $0x5c] sm:$0xf]
    %v141 = vld [vmem:[%s1 + $0x60] sm:$0xf]
    %v142 = vld [vmem:[%s1 + $0x64] sm:$0xf]
    %v143 = vld [vmem:[%s1 + $0x68] sm:$0xf]
    %v144 = vld [vmem:[%s1 + $0x6c] sm:$0xf]
    %v145 = vld [vmem:[%s1 + $0x70] sm:$0xf]
    %v146 = vld [vmem:[%s1 + $0x74] sm:$0xf]
    %v147 = vld [vmem:[%s1 + $0x78] sm:$0xf]
    %v148 = vld [vmem:[%s1 + $0x7c] sm:$0xf]
    %v149 = vld [vmem:[%s1 + $0x80] sm:$0xf]
    %v150 = vld [vmem:[%s1 + $0x84] sm:$0xf]
    %v151 = vld [vmem:[%s1 + $0x88] sm:$0xf]
    %v152 = vld [vmem:[%s1 + $0x8c] sm:$0xf]
    %v153 = vld [vmem:[%s1 + $0x90] sm:$0xf]
    %v154 = vld [vmem:[%s1 + $0x94] sm:$0xf]
    %v155 = vld [vmem:[%s1 + $0x98] sm:$0xf]
    %v156 = vld [vmem:[%s1 + $0x9c] sm:$0xf]
    %v157 = vld [vmem:[%s1 + $0xa0] sm:$0xf]
    %v158 = vld [vmem:[%s1 + $0xa4] sm:$0xf]
    %v159 = vld [vmem:[%s1 + $0xa8] sm:$0xf]
    %v160 = vld [vmem:[%s1 + $0xac] sm:$0xf]
    %v161 = vld [vmem:[%s1 + $0xb0] sm:$0xf]
    %v162 = vld [vmem:[%s1 + $0xb4] sm:$0xf]
    %v163 = vld [vmem:[%s1 + $0xb8] sm:$0xf]
    %v164 = vld [vmem:[%s1 + $0xbc] sm:$0xf]
    %v165 = vld [vmem:[%s1 + $0xc0] sm:$0xf]
    %v166 = vld [vmem:[%s1 + $0xc4] sm:$0xf]
    %v167 = vld [vmem:[%s1 + $0xc8] sm:$0xf]
    %v168 = vld [vmem:[%s1 + $0xcc] sm:$0xf]
    %v169 = vld [vmem:[%s1 + $0xd0] sm:$0xf]
    %v170 = vld [vmem:[%s1 + $0xd4] sm:$0xf]
    %v171 = vld [vmem:[%s1 + $0xd8] sm:$0xf]
    %v172 = vld [vmem:[%s1 + $0xdc] sm:$0xf]
    %v173 = vld [vmem:[%s1 + $0xe0] sm:$0xf]
    %v174 = vld [vmem:[%s1 + $0xe4] sm:$0xf]
    %v175 = vld [vmem:[%s1 + $0xe8] sm:$0xf]
    %v176 = vld [vmem:[%s1 + $0xec] sm:$0xf]
    %v177 = vld [vmem:[%s1 + $0xf0] sm:$0xf]
    %v178 = vld [vmem:[%s1 + $0xf4] sm:$0xf]
    %v179 = vld [vmem:[%s1 + $0xf8] sm:$0xf]
    %v180 = vld [vmem:[%s1 + $0xfc] sm:$0xf]
    %v181 = vld [vmem:[%s1 + $0x100] sm:$0xf]
    %v182 = vld [vmem:[%s1 + $0x104] sm:$0xf]
    %v183 = vld [vmem:[%s1 + $0x108] sm:$0xf]
    %v184 = vld [vmem:[%s1 + $0x10c] sm:$0xf]
    %v185 = vld [vmem:[%s1 + $0x110] sm:$0xf]
    %v186 = vld [vmem:[%s1 + $0x114] sm:$0xf]
    %v187 = vld [vmem:[%s1 + $0x118] sm:$0xf]
    %v188 = vld [vmem:[%s1 + $0x11c] sm:$0xf]
    %v189 = vld [vmem:[%s1 + $0x120] sm:$0xf]
    %v190 = vld [vmem:[%s1 + $0x124] sm:$0xf]
    %v191 = vld [vmem:[%s1 + $0x128] sm:$0xf]
    %v192 = vld [vmem:[%s1 + $0x12c] sm:$0xf]
    %v193 = vld [vmem:[%s1 + $0x130] sm:$0xf]
    %v194 = vld [vmem:[%s1 + $0x134] sm:$0xf]
    %v195 = vld [vmem:[%s1 + $0x138] sm:$0xf]
    %v196 = vld [vmem:[%s1 + $0x13c] sm:$0xf]
    %v197 = vld [vmem:[%s1 + $0x140] sm:$0xf]
    %v198 = vld [vmem:[%s1 + $0x144] sm:$0xf]
    %v199 = vld [vmem:[%s1 + $0x148] sm:$0xf]
    %v200 = vld [vmem:[%s1 + $0x14c] sm:$0xf]
    %v201 = vld [vmem:[%s1 + $0x150] sm:$0xf]
    %v202 = vld [vmem:[%s1 + $0x154] sm:$0xf]
    %v203 = vld [vmem:[%s1 + $0x158] sm:$0xf]
    %v204 = vld [vmem:[%s1 + $0x15c] sm:$0xf]
    %v205 = vld [vmem:[%s1 + $0x160] sm:$0xf]
    %v206 = vld [vmem:[%s1 + $0x164] sm:$0xf]
    %v207 = vld [vmem:[%s1 + $0x168] sm:$0xf]
    %v208 = vld [vmem:[%s1 + $0x16c] sm:$0xf]
    %v209 = vld [vmem:[%s1 + $0x170] sm:$0xf]
    %v210 = vld [vmem:[%s1 + $0x174] sm:$0xf]
    %v211 = vld [vmem:[%s1 + $0x178] sm:$0xf]
    %v212 = vld [vmem:[%s1 + $0x17c] sm:$0xf]
    %v213 = vld [vmem:[%s1 + $0x180] sm:$0xf]
    %v214 = vld [vmem:[%s1 + $0x184] sm:$0xf]
    %v215 = vld [vmem:[%s1 + $0x188] sm:$0xf]
    %v216 = vld [vmem:[%s1 + $0x18c] sm:$0xf]
    %v217 = vld [vmem:[%s1 + $0x190] sm:$0xf]
    %v218 = vld [vmem:[%s1 + $0x194] sm:$0xf]
    %v219 = vld [vmem:[%s1 + $0x198] sm:$0xf]
    %v220 = vld [vmem:[%s1 + $0x19c] sm:$0xf]
    %v221 = vld [vmem:[%s1 + $0x1a0] sm:$0xf]
    %v222 = vld [vmem:[%s1 + $0x1a4] sm:$0xf]
    %v223 = vld [vmem:[%s1 + $0x1a8] sm:$0xf]
    %v224 = vld [vmem:[%s1 + $0x1ac] sm:$0xf]
    %v225 = vld [vmem:[%s1 + $0x1b0] sm:$0xf]
    %v226 = vld [vmem:[%s1 + $0x1b4] sm:$0xf]
    %v227 = vld [vmem:[%s1 + $0x1b8] sm:$0xf]
    %v228 = vld [vmem:[%s1 + $0x1bc] sm:$0xf]
    %v229 = vld [vmem:[%s1 + $0x1c0] sm:$0xf]
    %v230 = vld [vmem:[%s1 + $0x1c4] sm:$0xf]
    %v231 = vld [vmem:[%s1 + $0x1c8] sm:$0xf]
    %v232 = vld [vmem:[%s1 + $0x1cc] sm:$0xf]
    %v233 = vld [vmem:[%s1 + $0x1d0] sm:$0xf]
    %v234 = vld [vmem:[%s1 + $0x1d4] sm:$0xf]
    %v235 = vld [vmem:[%s1 + $0x1d8] sm:$0xf]
    %v236 = vld [vmem:[%s1 + $0x1dc] sm:$0xf]
    %v237 = vld [vmem:[%s1 + $0x1e0] sm:$0xf]
    %v238 = vld [vmem:[%s1 + $0x1e4] sm:$0xf]
    %v239 = vld [vmem:[%s1 + $0x1e8] sm:$0xf]
    %v240 = vld [vmem:[%s1 + $0x1ec] sm:$0xf]
    %v241 = vld [vmem:[%s1 + $0x1f0] sm:$0xf]
    %v242 = vld [vmem:[%s1 + $0x1f4] sm:$0xf]
    %v243 = vld [vmem:[%s1 + $0x1f8] sm:$0xf]
    %v244 = vld [vmem:[%s1 + $0x1fc] sm:$0xf]
    %v245 = vld [vmem:[%s2] sm:$0x1]
    %v247 = vlaneseq
    %v248 = vshrl.u32 %v247, 7
    %v249 = vsub.s32 0, %v248
    %v250 = vrot.slane %v245, %v249
    %v380 = vunpack.c.l.b16 %v117
    %v381 = vunpack.c.l.b16 %v118
    %v382 = vunpack.c.l.b16 %v119
    %v383 = vunpack.c.l.b16 %v120
    %v384 = vunpack.c.l.b16 %v121
    %v385 = vunpack.c.l.b16 %v122
    %v386 = vunpack.c.l.b16 %v123
    %v387 = vunpack.c.l.b16 %v124
    %v388 = vunpack.c.l.b16 %v125
    %v389 = vunpack.c.l.b16 %v126
    %v390 = vunpack.c.l.b16 %v127
    %v391 = vunpack.c.l.b16 %v128
    %v392 = vunpack.c.l.b16 %v129
    %v393 = vunpack.c.l.b16 %v130
    %v394 = vunpack.c.l.b16 %v131
    %v395 = vunpack.c.l.b16 %v132
    %v396 = vunpack.c.l.b16 %v133
    %v397 = vunpack.c.l.b16 %v134
    %v398 = vunpack.c.l.b16 %v135
    %v399 = vunpack.c.l.b16 %v136
    %v400 = vunpack.c.l.b16 %v137
    %v401 = vunpack.c.l.b16 %v138
    %v402 = vunpack.c.l.b16 %v139
    %v403 = vunpack.c.l.b16 %v140
    %v404 = vunpack.c.l.b16 %v141
    %v405 = vunpack.c.l.b16 %v142
    %v406 = vunpack.c.l.b16 %v143
    %v407 = vunpack.c.l.b16 %v144
    %v408 = vunpack.c.l.b16 %v145
    %v409 = vunpack.c.l.b16 %v146
    %v410 = vunpack.c.l.b16 %v147
    %v411 = vunpack.c.l.b16 %v148
    %v412 = vunpack.c.l.b16 %v149
    %v413 = vunpack.c.l.b16 %v150
    %v414 = vunpack.c.l.b16 %v151
    %v415 = vunpack.c.l.b16 %v152
    %v416 = vunpack.c.l.b16 %v153
    %v417 = vunpack.c.l.b16 %v154
    %v418 = vunpack.c.l.b16 %v155
    %v419 = vunpack.c.l.b16 %v156
    %v420 = vunpack.c.l.b16 %v157
    %v421 = vunpack.c.l.b16 %v158
    %v422 = vunpack.c.l.b16 %v159
    %v423 = vunpack.c.l.b16 %v160
    %v424 = vunpack.c.l.b16 %v161
    %v425 = vunpack.c.l.b16 %v162
    %v426 = vunpack.c.l.b16 %v163
    %v427 = vunpack.c.l.b16 %v164
    %v428 = vunpack.c.l.b16 %v165
    %v429 = vunpack.c.l.b16 %v166
    %v430 = vunpack.c.l.b16 %v167
    %v431 = vunpack.c.l.b16 %v168
    %v432 = vunpack.c.l.b16 %v169
    %v433 = vunpack.c.l.b16 %v170
    %v434 = vunpack.c.l.b16 %v171
    %v435 = vunpack.c.l.b16 %v172
    %v436 = vunpack.c.l.b16 %v173
    %v437 = vunpack.c.l.b16 %v174
    %v438 = vunpack.c.l.b16 %v175
    %v439 = vunpack.c.l.b16 %v176
    %v440 = vunpack.c.l.b16 %v177
    %v441 = vunpack.c.l.b16 %v178
    %v442 = vunpack.c.l.b16 %v179
    %v443 = vunpack.c.l.b16 %v180
    %v444 = vunpack.c.l.b16 %v181
    %v445 = vunpack.c.l.b16 %v182
    %v446 = vunpack.c.l.b16 %v183
    %v447 = vunpack.c.l.b16 %v184
    %v448 = vunpack.c.l.b16 %v185
    %v449 = vunpack.c.l.b16 %v186
    %v450 = vunpack.c.l.b16 %v187
    %v451 = vunpack.c.l.b16 %v188
    %v452 = vunpack.c.l.b16 %v189
    %v453 = vunpack.c.l.b16 %v190
    %v454 = vunpack.c.l.b16 %v191
    %v455 = vunpack.c.l.b16 %v192
    %v456 = vunpack.c.l.b16 %v193
    %v457 = vunpack.c.l.b16 %v194
    %v458 = vunpack.c.l.b16 %v195
    %v459 = vunpack.c.l.b16 %v196
    %v460 = vunpack.c.l.b16 %v197
    %v461 = vunpack.c.l.b16 %v198
    %v462 = vunpack.c.l.b16 %v199
    %v463 = vunpack.c.l.b16 %v200
    %v464 = vunpack.c.l.b16 %v201
    %v465 = vunpack.c.l.b16 %v202
    %v466 = vunpack.c.l.b16 %v203
    %v467 = vunpack.c.l.b16 %v204
    %v468 = vunpack.c.l.b16 %v205
    %v469 = vunpack.c.l.b16 %v206
    %v470 = vunpack.c.l.b16 %v207
    %v471 = vunpack.c.l.b16 %v208
    %v472 = vunpack.c.l.b16 %v209
    %v473 = vunpack.c.l.b16 %v210
    %v474 = vunpack.c.l.b16 %v211
    %v475 = vunpack.c.l.b16 %v212
    %v476 = vunpack.c.l.b16 %v213
    %v477 = vunpack.c.l.b16 %v214
    %v478 = vunpack.c.l.b16 %v215
    %v479 = vunpack.c.l.b16 %v216
    %v480 = vunpack.c.l.b16 %v217
    %v481 = vunpack.c.l.b16 %v218
    %v482 = vunpack.c.l.b16 %v219
    %v483 = vunpack.c.l.b16 %v220
    %v484 = vunpack.c.l.b16 %v221
    %v485 = vunpack.c.l.b16 %v222
    %v486 = vunpack.c.l.b16 %v223
    %v487 = vunpack.c.l.b16 %v224
    %v488 = vunpack.c.l.b16 %v225
    %v489 = vunpack.c.l.b16 %v226
    %v490 = vunpack.c.l.b16 %v227
    %v491 = vunpack.c.l.b16 %v228
    %v492 = vunpack.c.l.b16 %v229
    %v493 = vunpack.c.l.b16 %v230
    %v494 = vunpack.c.l.b16 %v231
    %v495 = vunpack.c.l.b16 %v232
    %v496 = vunpack.c.l.b16 %v233
    %v497 = vunpack.c.l.b16 %v234
    %v498 = vunpack.c.l.b16 %v235
    %v499 = vunpack.c.l.b16 %v236
    %v500 = vunpack.c.l.b16 %v237
    %v501 = vunpack.c.l.b16 %v238
    %v502 = vunpack.c.l.b16 %v239
    %v503 = vunpack.c.l.b16 %v240
    %v504 = vunpack.c.l.b16 %v241
    %v505 = vunpack.c.l.b16 %v242
    %v506 = vunpack.c.l.b16 %v243
    %v507 = vunpack.c.l.b16 %v244
    %v508 = vpack.c.b16 %v381, %v380
    %v509 = vpack.c.b16 %v383, %v382
    %v510 = vpack.c.b16 %v385, %v384
    %v511 = vpack.c.b16 %v387, %v386
    %v512 = vpack.c.b16 %v389, %v388
    %v513 = vpack.c.b16 %v391, %v390
    %v514 = vpack.c.b16 %v393, %v392
    %v515 = vpack.c.b16 %v395, %v394
    %v516 = vpack.c.b16 %v397, %v396
    %v517 = vpack.c.b16 %v399, %v398
    %v518 = vpack.c.b16 %v401, %v400
    %v519 = vpack.c.b16 %v403, %v402
    %v520 = vpack.c.b16 %v405, %v404
    %v521 = vpack.c.b16 %v407, %v406
    %v522 = vpack.c.b16 %v409, %v408
    %v523 = vpack.c.b16 %v411, %v410
    %v524 = vpack.c.b16 %v413, %v412
    %v525 = vpack.c.b16 %v415, %v414
    %v526 = vpack.c.b16 %v417, %v416
    %v527 = vpack.c.b16 %v419, %v418
    %v528 = vpack.c.b16 %v421, %v420
    %v529 = vpack.c.b16 %v423, %v422
    %v530 = vpack.c.b16 %v425, %v424
    %v531 = vpack.c.b16 %v427, %v426
    %v532 = vpack.c.b16 %v429, %v428
    %v533 = vpack.c.b16 %v431, %v430
    %v534 = vpack.c.b16 %v433, %v432
    %v535 = vpack.c.b16 %v435, %v434
    %v536 = vpack.c.b16 %v437, %v436
    %v537 = vpack.c.b16 %v439, %v438
    %v538 = vpack.c.b16 %v441, %v440
    %v539 = vpack.c.b16 %v443, %v442
    %v540 = vpack.c.b16 %v445, %v444
    %v541 = vpack.c.b16 %v447, %v446
    %v542 = vpack.c.b16 %v449, %v448
    %v543 = vpack.c.b16 %v451, %v450
    %v544 = vpack.c.b16 %v453, %v452
    %v545 = vpack.c.b16 %v455, %v454
    %v546 = vpack.c.b16 %v457, %v456
    %v547 = vpack.c.b16 %v459, %v458
    %v548 = vpack.c.b16 %v461, %v460
    %v549 = vpack.c.b16 %v463, %v462
    %v550 = vpack.c.b16 %v465, %v464
    %v551 = vpack.c.b16 %v467, %v466
    %v552 = vpack.c.b16 %v469, %v468
    %v553 = vpack.c.b16 %v471, %v470
    %v554 = vpack.c.b16 %v473, %v472
    %v555 = vpack.c.b16 %v475, %v474
    %v556 = vpack.c.b16 %v477, %v476
    %v557 = vpack.c.b16 %v479, %v478
    %v558 = vpack.c.b16 %v481, %v480
    %v559 = vpack.c.b16 %v483, %v482
    %v560 = vpack.c.b16 %v485, %v484
    %v561 = vpack.c.b16 %v487, %v486
    %v562 = vpack.c.b16 %v489, %v488
    %v563 = vpack.c.b16 %v491, %v490
    %v564 = vpack.c.b16 %v493, %v492
    %v565 = vpack.c.b16 %v495, %v494
    %v566 = vpack.c.b16 %v497, %v496
    %v567 = vpack.c.b16 %v499, %v498
    %v568 = vpack.c.b16 %v501, %v500
    %v569 = vpack.c.b16 %v503, %v502
    %v570 = vpack.c.b16 %v505, %v504
    %v571 = vpack.c.b16 %v507, %v506
    %636 = vmatprep.subr.bf16.mxu0 0
    %637 = vmatpush1.bf16.msra.mxu0 %v515
    %638 = vmatprep.subr.bf16.mxu0 0
    %639 = vmatpush1.bf16.msra.mxu0 %v514
    %640 = vmatprep.subr.bf16.mxu0 0
    %641 = vmatpush1.bf16.msra.mxu0 %v513
    %642 = vmatprep.subr.bf16.mxu0 0
    %643 = vmatpush1.bf16.msra.mxu0 %v512
    %644 = vmatprep.subr.bf16.mxu0 0
    %645 = vmatpush1.bf16.msra.mxu0 %v511
    %646 = vmatprep.subr.bf16.mxu0 0
    %647 = vmatpush1.bf16.msra.mxu0 %v510
    %648 = vmatprep.subr.bf16.mxu0 0
    %649 = vmatpush1.bf16.msra.mxu0 %v509
    %650 = vmatprep.subr.bf16.mxu0 0
    %651 = vmatpush1.bf16.msra.mxu0 %v508
    %652 = vmatprep.subr.bf16.mxu0 0
    %653 = vmatpush2.bf16.msra.mxu0 %v523
    %654 = vmatprep.subr.bf16.mxu0 0
    %655 = vmatpush2.bf16.msra.mxu0 %v522
    %656 = vmatprep.subr.bf16.mxu0 0
    %657 = vmatpush2.bf16.msra.mxu0 %v521
    %658 = vmatprep.subr.bf16.mxu0 0
    %659 = vmatpush2.bf16.msra.mxu0 %v520
    %660 = vmatprep.subr.bf16.mxu0 0
    %661 = vmatpush2.bf16.msra.mxu0 %v519
    %662 = vmatprep.subr.bf16.mxu0 0
    %663 = vmatpush2.bf16.msra.mxu0 %v518
    %664 = vmatprep.subr.bf16.mxu0 0
    %665 = vmatpush2.bf16.msra.mxu0 %v517
    %666 = vmatprep.subr.bf16.mxu0 0
    %667 = vmatpush2.bf16.msra.mxu0 %v516
    %668 = vmatprep.mubr.bf16.mxu0 %v110
    %669 = vmatmul.mubr.bf16.gmra.mxu0 %v109
    %v670 = vpop.f32.mrf.mxu0
    %v671 = vadd.f32 %v250, %v670
    %v672 = vpop.f32.mrf.mxu0
    %v673 = vpop.f32.mrf.mxu0
    %v674 = vpop.f32.mrf.mxu0
    %675 = vdwg.mxu0
    %676 = vmatprep.subr.bf16.mxu0 0
    %677 = vmatpush1.bf16.msra.mxu0 %v531
    %678 = vmatprep.subr.bf16.mxu0 0
    %679 = vmatpush1.bf16.msra.mxu0 %v530
    %680 = vmatprep.subr.bf16.mxu0 0
    %681 = vmatpush1.bf16.msra.mxu0 %v529
    %682 = vmatprep.subr.bf16.mxu0 0
    %683 = vmatpush1.bf16.msra.mxu0 %v528
    %684 = vmatprep.subr.bf16.mxu0 0
    %685 = vmatpush1.bf16.msra.mxu0 %v527
    %686 = vmatprep.subr.bf16.mxu0 0
    %687 = vmatpush1.bf16.msra.mxu0 %v526
    %688 = vmatprep.subr.bf16.mxu0 0
    %689 = vmatpush1.bf16.msra.mxu0 %v525
    %690 = vmatprep.subr.bf16.mxu0 0
    %691 = vmatpush1.bf16.msra.mxu0 %v524
    %692 = vmatprep.subr.bf16.mxu0 0
    %693 = vmatpush2.bf16.msra.mxu0 %v539
    %694 = vmatprep.subr.bf16.mxu0 0
    %695 = vmatpush2.bf16.msra.mxu0 %v538
    %696 = vmatprep.subr.bf16.mxu0 0
    %697 = vmatpush2.bf16.msra.mxu0 %v537
    %698 = vmatprep.subr.bf16.mxu0 0
    %699 = vmatpush2.bf16.msra.mxu0 %v536
    %700 = vmatprep.subr.bf16.mxu0 0
    %701 = vmatpush2.bf16.msra.mxu0 %v535
    %702 = vmatprep.subr.bf16.mxu0 0
    %703 = vmatpush2.bf16.msra.mxu0 %v534
    %704 = vmatprep.subr.bf16.mxu0 0
    %705 = vmatpush2.bf16.msra.mxu0 %v533
    %706 = vmatprep.subr.bf16.mxu0 0
    %707 = vmatpush2.bf16.msra.mxu0 %v532
    %708 = vmatprep.mubr.bf16.mxu0 %v112
    %709 = vmatmul.mubr.bf16.gmra.mxu0 %v111
    %v710 = vpop.f32.mrf.mxu0
    %v711 = vadd.f32 %v671, %v710
    %v712 = vpop.f32.mrf.mxu0
    %v713 = vpop.f32.mrf.mxu0
    %v714 = vpop.f32.mrf.mxu0
    %715 = vdwg.mxu0
    %716 = vmatprep.subr.bf16.mxu0 0
    %717 = vmatpush1.bf16.msra.mxu0 %v547
    %718 = vmatprep.subr.bf16.mxu0 0
    %719 = vmatpush1.bf16.msra.mxu0 %v546
    %720 = vmatprep.subr.bf16.mxu0 0
    %721 = vmatpush1.bf16.msra.mxu0 %v545
    %722 = vmatprep.subr.bf16.mxu0 0
    %723 = vmatpush1.bf16.msra.mxu0 %v544
    %724 = vmatprep.subr.bf16.mxu0 0
    %725 = vmatpush1.bf16.msra.mxu0 %v543
    %726 = vmatprep.subr.bf16.mxu0 0
    %727 = vmatpush1.bf16.msra.mxu0 %v542
    %728 = vmatprep.subr.bf16.mxu0 0
    %729 = vmatpush1.bf16.msra.mxu0 %v541
    %730 = vmatprep.subr.bf16.mxu0 0
    %731 = vmatpush1.bf16.msra.mxu0 %v540
    %732 = vmatprep.subr.bf16.mxu0 0
    %733 = vmatpush2.bf16.msra.mxu0 %v555
    %734 = vmatprep.subr.bf16.mxu0 0
    %735 = vmatpush2.bf16.msra.mxu0 %v554
    %736 = vmatprep.subr.bf16.mxu0 0
    %737 = vmatpush2.bf16.msra.mxu0 %v553
    %738 = vmatprep.subr.bf16.mxu0 0
    %739 = vmatpush2.bf16.msra.mxu0 %v552
    %740 = vmatprep.subr.bf16.mxu0 0
    %741 = vmatpush2.bf16.msra.mxu0 %v551
    %742 = vmatprep.subr.bf16.mxu0 0
    %743 = vmatpush2.bf16.msra.mxu0 %v550
    %744 = vmatprep.subr.bf16.mxu0 0
    %745 = vmatpush2.bf16.msra.mxu0 %v549
    %746 = vmatprep.subr.bf16.mxu0 0
    %747 = vmatpush2.bf16.msra.mxu0 %v548
    %748 = vmatprep.mubr.bf16.mxu0 %v114
    %749 = vmatmul.mubr.bf16.gmra.mxu0 %v113
    %v750 = vpop.f32.mrf.mxu0
    %v751 = vadd.f32 %v711, %v750
    %v752 = vpop.f32.mrf.mxu0
    %v753 = vpop.f32.mrf.mxu0
    %v754 = vpop.f32.mrf.mxu0
    %755 = vdwg.mxu0
    %756 = vmatprep.subr.bf16.mxu0 0
    %757 = vmatpush1.bf16.msra.mxu0 %v563
    %758 = vmatprep.subr.bf16.mxu0 0
    %759 = vmatpush1.bf16.msra.mxu0 %v562
    %760 = vmatprep.subr.bf16.mxu0 0
    %761 = vmatpush1.bf16.msra.mxu0 %v561
    %762 = vmatprep.subr.bf16.mxu0 0
    %763 = vmatpush1.bf16.msra.mxu0 %v560
    %764 = vmatprep.subr.bf16.mxu0 0
    %765 = vmatpush1.bf16.msra.mxu0 %v559
    %766 = vmatprep.subr.bf16.mxu0 0
    %767 = vmatpush1.bf16.msra.mxu0 %v558
    %768 = vmatprep.subr.bf16.mxu0 0
    %769 = vmatpush1.bf16.msra.mxu0 %v557
    %770 = vmatprep.subr.bf16.mxu0 0
    %771 = vmatpush1.bf16.msra.mxu0 %v556
    %772 = vmatprep.subr.bf16.mxu0 0
    %773 = vmatpush2.bf16.msra.mxu0 %v571
    %774 = vmatprep.subr.bf16.mxu0 0
    %775 = vmatpush2.bf16.msra.mxu0 %v570
    %776 = vmatprep.subr.bf16.mxu0 0
    %777 = vmatpush2.bf16.msra.mxu0 %v569
    %778 = vmatprep.subr.bf16.mxu0 0
    %779 = vmatpush2.bf16.msra.mxu0 %v568
    %780 = vmatprep.subr.bf16.mxu0 0
    %781 = vmatpush2.bf16.msra.mxu0 %v567
    %782 = vmatprep.subr.bf16.mxu0 0
    %783 = vmatpush2.bf16.msra.mxu0 %v566
    %784 = vmatprep.subr.bf16.mxu0 0
    %785 = vmatpush2.bf16.msra.mxu0 %v565
    %786 = vmatprep.subr.bf16.mxu0 0
    %787 = vmatpush2.bf16.msra.mxu0 %v564
    %788 = vmatprep.mubr.bf16.mxu0 %v116
    %789 = vmatmul.mubr.bf16.gmra.mxu0 %v115
    %v790 = vpop.f32.mrf.mxu0
    %v791 = vadd.f32 %v751, %v790
    %v792 = vpop.f32.mrf.mxu0
    %v793 = vpop.f32.mrf.mxu0
    %v794 = vpop.f32.mrf.mxu0
    %795 = vdwg.mxu0
    %v796 = vmul.f32 %v791, 0.5
    %v797 = vmul.f32 %v791, 0.70710677
    %v798 = verf.f32.pop %v797
    %v799 = vadd.f32 %v798, 1.0
    %v800 = vmul.f32 %v796, %v799
    %v801 = vpack.c.bf16 %v800, %v800
    %v802 = vld [vmem:[%s3] sm:$0xf]
    %v803 = vld [vmem:[%s3 + $0x4] sm:$0xf]
    %v804 = vld [vmem:[%s3 + $0x8] sm:$0xf]
    %v805 = vld [vmem:[%s3 + $0xc] sm:$0xf]
    %v806 = vld [vmem:[%s3 + $0x10] sm:$0xf]
    %v807 = vld [vmem:[%s3 + $0x14] sm:$0xf]
    %v808 = vld [vmem:[%s3 + $0x18] sm:$0xf]
    %v809 = vld [vmem:[%s3 + $0x1c] sm:$0xf]
    %v810 = vld [vmem:[%s3 + $0x20] sm:$0xf]
    %v811 = vld [vmem:[%s3 + $0x24] sm:$0xf]
    %v812 = vld [vmem:[%s3 + $0x28] sm:$0xf]
    %v813 = vld [vmem:[%s3 + $0x2c] sm:$0xf]
    %v814 = vld [vmem:[%s3 + $0x30] sm:$0xf]
    %v815 = vld [vmem:[%s3 + $0x34] sm:$0xf]
    %v816 = vld [vmem:[%s3 + $0x38] sm:$0xf]
    %v817 = vld [vmem:[%s3 + $0x3c] sm:$0xf]
    %v818 = vld [vmem:[%s4] sm:$0x1]
    %v820 = vlaneseq
    %v821 = vshrl.u32 %v820, 7
    %v822 = vsub.s32 0, %v821
    %v823 = vrot.slane %v818, %v822
    %v841 = vunpack.c.l.b16 %v802
    %v842 = vunpack.c.l.b16 %v803
    %v843 = vunpack.c.l.b16 %v804
    %v844 = vunpack.c.l.b16 %v805
    %v845 = vunpack.c.l.b16 %v806
    %v846 = vunpack.c.l.b16 %v807
    %v847 = vunpack.c.l.b16 %v808
    %v848 = vunpack.c.l.b16 %v809
    %v849 = vunpack.c.l.b16 %v810
    %v850 = vunpack.c.l.b16 %v811
    %v851 = vunpack.c.l.b16 %v812
    %v852 = vunpack.c.l.b16 %v813
    %v853 = vunpack.c.l.b16 %v814
    %v854 = vunpack.c.l.b16 %v815
    %v855 = vunpack.c.l.b16 %v816
    %v856 = vunpack.c.l.b16 %v817
    %v857 = vpack.c.b16 %v842, %v841
    %v858 = vpack.c.b16 %v844, %v843
    %v859 = vpack.c.b16 %v846, %v845
    %v860 = vpack.c.b16 %v848, %v847
    %v861 = vpack.c.b16 %v850, %v849
    %v862 = vpack.c.b16 %v852, %v851
    %v863 = vpack.c.b16 %v854, %v853
    %v864 = vpack.c.b16 %v856, %v855
    %873 = vmatprep.subr.bf16.mxu0 0
    %874 = vmatpush1.bf16.msra.mxu0 %v864
    %875 = vmatprep.subr.bf16.mxu0 0
    %876 = vmatpush1.bf16.msra.mxu0 %v863
    %877 = vmatprep.subr.bf16.mxu0 0
    %878 = vmatpush1.bf16.msra.mxu0 %v862
    %879 = vmatprep.subr.bf16.mxu0 0
    %880 = vmatpush1.bf16.msra.mxu0 %v861
    %881 = vmatprep.subr.bf16.mxu0 0
    %882 = vmatpush1.bf16.msra.mxu0 %v860
    %883 = vmatprep.subr.bf16.mxu0 0
    %884 = vmatpush1.bf16.msra.mxu0 %v859
    %885 = vmatprep.subr.bf16.mxu0 0
    %886 = vmatpush1.bf16.msra.mxu0 %v858
    %887 = vmatprep.subr.bf16.mxu0 0
    %888 = vmatpush1.bf16.msra.mxu0 %v857
    %889 = vmatprep.subr.bf16.mxu0 0
    %890 = vmatpush2.bf16.msra.mxu0 0
    %891 = vmatprep.subr.bf16.mxu0 0
    %892 = vmatpush2.bf16.msra.mxu0 0
    %893 = vmatprep.subr.bf16.mxu0 0
    %894 = vmatpush2.bf16.msra.mxu0 0
    %895 = vmatprep.subr.bf16.mxu0 0
    %896 = vmatpush2.bf16.msra.mxu0 0
    %897 = vmatprep.subr.bf16.mxu0 0
    %898 = vmatpush2.bf16.msra.mxu0 0
    %899 = vmatprep.subr.bf16.mxu0 0
    %900 = vmatpush2.bf16.msra.mxu0 0
    %901 = vmatprep.subr.bf16.mxu0 0
    %902 = vmatpush2.bf16.msra.mxu0 0
    %903 = vmatprep.subr.bf16.mxu0 0
    %904 = vmatpush2.bf16.msra.mxu0 0
    %905 = vmatprep.mubr.bf16.mxu0 0
    %906 = vmatmul.mubr.bf16.gmra.mxu0 %v801
    %v907 = vpop.f32.mrf.mxu0
    %v908 = vadd.f32 %v823, %v907
    %v909 = vpop.f32.mrf.mxu0
    %v910 = vpop.f32.mrf.mxu0
    %v911 = vpop.f32.mrf.mxu0
    %912 = vdwg.mxu0
    %v913 = vmul.f32 %v908, 0.5
    %v914 = vmul.f32 %v908, 0.70710677
    %v915 = verf.f32.pop %v914
    %v916 = vadd.f32 %v915, 1.0
    %v917 = vmul.f32 %v913, %v916
    %v918 = vpack.c.bf16 %v917, %v917
    %v919 = vld [vmem:[#allocation2] sm:$0xf]
    %v920 = vld [vmem:[#allocation2 + $0x4] sm:$0xf]
    %v921 = vld [vmem:[#allocation2 + $0x8] sm:$0xf]
    %v922 = vld [vmem:[#allocation2 + $0xc] sm:$0xf]
    %v923 = vld [vmem:[#allocation2 + $0x10] sm:$0xf]
    %v924 = vld [vmem:[#allocation2 + $0x14] sm:$0xf]
    %v925 = vld [vmem:[#allocation2 + $0x18] sm:$0xf]
    %v926 = vld [vmem:[#allocation2 + $0x1c] sm:$0xf]
    %v927 = vld [vmem:[#allocation2 + $0x20] sm:$0xf]
    %v928 = vld [vmem:[#allocation2 + $0x24] sm:$0xf]
    %v929 = vld [vmem:[#allocation2 + $0x28] sm:$0xf]
    %v930 = vld [vmem:[#allocation2 + $0x2c] sm:$0xf]
    %v931 = vld [vmem:[#allocation2 + $0x30] sm:$0xf]
    %v932 = vld [vmem:[#allocation2 + $0x34] sm:$0xf]
    %v933 = vld [vmem:[#allocation2 + $0x38] sm:$0xf]
    %v934 = vld [vmem:[#allocation2 + $0x3c] sm:$0xf]
    %v935 = vld [vmem:[%s6] sm:$0x1]
    %v937 = vlaneseq
    %v938 = vshrl.u32 %v937, 7
    %v939 = vsub.s32 0, %v938
    %v940 = vrot.slane %v935, %v939
    %v958 = vunpack.c.l.b16 %v919
    %v959 = vunpack.c.l.b16 %v920
    %v960 = vunpack.c.l.b16 %v921
    %v961 = vunpack.c.l.b16 %v922
    %v962 = vunpack.c.l.b16 %v923
    %v963 = vunpack.c.l.b16 %v924
    %v964 = vunpack.c.l.b16 %v925
    %v965 = vunpack.c.l.b16 %v926
    %v966 = vunpack.c.l.b16 %v927
    %v967 = vunpack.c.l.b16 %v928
    %v968 = vunpack.c.l.b16 %v929
    %v969 = vunpack.c.l.b16 %v930
    %v970 = vunpack.c.l.b16 %v931
    %v971 = vunpack.c.l.b16 %v932
    %v972 = vunpack.c.l.b16 %v933
    %v973 = vunpack.c.l.b16 %v934
    %v974 = vpack.c.b16 %v959, %v958
    %v975 = vpack.c.b16 %v961, %v960
    %v976 = vpack.c.b16 %v963, %v962
    %v977 = vpack.c.b16 %v965, %v964
    %v978 = vpack.c.b16 %v967, %v966
    %v979 = vpack.c.b16 %v969, %v968
    %v980 = vpack.c.b16 %v971, %v970
    %v981 = vpack.c.b16 %v973, %v972
    %990 = vmatprep.subr.bf16.mxu0 0
    %991 = vmatpush1.bf16.msra.mxu0 %v981
    %992 = vmatprep.subr.bf16.mxu0 0
    %993 = vmatpush1.bf16.msra.mxu0 %v980
    %994 = vmatprep.subr.bf16.mxu0 0
    %995 = vmatpush1.bf16.msra.mxu0 %v979
    %996 = vmatprep.subr.bf16.mxu0 0
    %997 = vmatpush1.bf16.msra.mxu0 %v978
    %998 = vmatprep.subr.bf16.mxu0 0
    %999 = vmatpush1.bf16.msra.mxu0 %v977
    %1000 = vmatprep.subr.bf16.mxu0 0
    %1001 = vmatpush1.bf16.msra.mxu0 %v976
    %1002 = vmatprep.subr.bf16.mxu0 0
    %1003 = vmatpush1.bf16.msra.mxu0 %v975
    %1004 = vmatprep.subr.bf16.mxu0 0
    %1005 = vmatpush1.bf16.msra.mxu0 %v974
    %1006 = vmatprep.subr.bf16.mxu0 0
    %1007 = vmatpush2.bf16.msra.mxu0 0
    %1008 = vmatprep.subr.bf16.mxu0 0
    %1009 = vmatpush2.bf16.msra.mxu0 0
    %1010 = vmatprep.subr.bf16.mxu0 0
    %1011 = vmatpush2.bf16.msra.mxu0 0
    %1012 = vmatprep.subr.bf16.mxu0 0
    %1013 = vmatpush2.bf16.msra.mxu0 0
    %1014 = vmatprep.subr.bf16.mxu0 0
    %1015 = vmatpush2.bf16.msra.mxu0 0
    %1016 = vmatprep.subr.bf16.mxu0 0
    %1017 = vmatpush2.bf16.msra.mxu0 0
    %1018 = vmatprep.subr.bf16.mxu0 0
    %1019 = vmatpush2.bf16.msra.mxu0 0
    %1020 = vmatprep.subr.bf16.mxu0 0
    %1021 = vmatpush2.bf16.msra.mxu0 0
    %1022 = vmatprep.mubr.bf16.mxu0 0
    %1023 = vmatmul.mubr.bf16.gmra.mxu0 %v918
    %v1024 = vpop.f32.mrf.mxu0
    %v1025 = vadd.f32 %v940, %v1024
    %v1026 = vpop.f32.mrf.mxu0
    %v1027 = vpop.f32.mrf.mxu0
    %v1028 = vpop.f32.mrf.mxu0
    %1029 = vdwg.mxu0
    %v1030 = vmul.f32 %v1025, 0.5
    %v1031 = vmul.f32 %v1025, 0.70710677
    %v1032 = verf.f32.pop %v1031
    %v1033 = vadd.f32 %v1032, 1.0
    %v1034 = vmul.f32 %v1030, %v1033
    %v1035 = vpack.c.bf16 %v1034, %v1034
    %v1036 = vld [vmem:[#allocation5] sm:$0xf]
    %v1037 = vld [vmem:[#allocation5 + $0x4] sm:$0xf]
    %v1038 = vld [vmem:[#allocation5 + $0x8] sm:$0xf]
    %v1039 = vld [vmem:[#allocation5 + $0xc] sm:$0xf]
    %v1040 = vld [vmem:[#allocation5 + $0x10] sm:$0xf]
    %v1041 = vld [vmem:[#allocation5 + $0x14] sm:$0xf]
    %v1042 = vld [vmem:[#allocation5 + $0x18] sm:$0xf]
    %v1043 = vld [vmem:[#allocation5 + $0x1c] sm:$0xf]
    %v1044 = vld [vmem:[#allocation5 + $0x20] sm:$0xf]
    %v1045 = vld [vmem:[#allocation5 + $0x24] sm:$0xf]
    %v1046 = vld [vmem:[#allocation5 + $0x28] sm:$0xf]
    %v1047 = vld [vmem:[#allocation5 + $0x2c] sm:$0xf]
    %v1048 = vld [vmem:[#allocation5 + $0x30] sm:$0xf]
    %v1049 = vld [vmem:[#allocation5 + $0x34] sm:$0xf]
    %v1050 = vld [vmem:[#allocation5 + $0x38] sm:$0xf]
    %v1051 = vld [vmem:[#allocation5 + $0x3c] sm:$0xf]
    %v1052 = vld [vmem:[%s8] sm:$0x1]
    %v1054 = vlaneseq
    %v1055 = vshrl.u32 %v1054, 7
    %v1056 = vsub.s32 0, %v1055
    %v1057 = vrot.slane %v1052, %v1056
    %v1075 = vunpack.c.l.b16 %v1036
    %v1076 = vunpack.c.l.b16 %v1037
    %v1077 = vunpack.c.l.b16 %v1038
    %v1078 = vunpack.c.l.b16 %v1039
    %v1079 = vunpack.c.l.b16 %v1040
    %v1080 = vunpack.c.l.b16 %v1041
    %v1081 = vunpack.c.l.b16 %v1042
    %v1082 = vunpack.c.l.b16 %v1043
    %v1083 = vunpack.c.l.b16 %v1044
    %v1084 = vunpack.c.l.b16 %v1045
    %v1085 = vunpack.c.l.b16 %v1046
    %v1086 = vunpack.c.l.b16 %v1047
    %v1087 = vunpack.c.l.b16 %v1048
    %v1088 = vunpack.c.l.b16 %v1049
    %v1089 = vunpack.c.l.b16 %v1050
    %v1090 = vunpack.c.l.b16 %v1051
    %v1091 = vpack.c.b16 %v1076, %v1075
    %v1092 = vpack.c.b16 %v1078, %v1077
    %v1093 = vpack.c.b16 %v1080, %v1079
    %v1094 = vpack.c.b16 %v1082, %v1081
    %v1095 = vpack.c.b16 %v1084, %v1083
    %v1096 = vpack.c.b16 %v1086, %v1085
    %v1097 = vpack.c.b16 %v1088, %v1087
    %v1098 = vpack.c.b16 %v1090, %v1089
    %1107 = vmatprep.subr.bf16.mxu0 0
    %1108 = vmatpush1.bf16.msra.mxu0 %v1098
    %1109 = vmatprep.subr.bf16.mxu0 0
    %1110 = vmatpush1.bf16.msra.mxu0 %v1097
    %1111 = vmatprep.subr.bf16.mxu0 0
    %1112 = vmatpush1.bf16.msra.mxu0 %v1096
    %1113 = vmatprep.subr.bf16.mxu0 0
    %1114 = vmatpush1.bf16.msra.mxu0 %v1095
    %1115 = vmatprep.subr.bf16.mxu0 0
    %1116 = vmatpush1.bf16.msra.mxu0 %v1094
    %1117 = vmatprep.subr.bf16.mxu0 0
    %1118 = vmatpush1.bf16.msra.mxu0 %v1093
    %1119 = vmatprep.subr.bf16.mxu0 0
    %1120 = vmatpush1.bf16.msra.mxu0 %v1092
    %1121 = vmatprep.subr.bf16.mxu0 0
    %1122 = vmatpush1.bf16.msra.mxu0 %v1091
    %1123 = vmatprep.subr.bf16.mxu0 0
    %1124 = vmatpush2.bf16.msra.mxu0 0
    %1125 = vmatprep.subr.bf16.mxu0 0
    %1126 = vmatpush2.bf16.msra.mxu0 0
    %1127 = vmatprep.subr.bf16.mxu0 0
    %1128 = vmatpush2.bf16.msra.mxu0 0
    %1129 = vmatprep.subr.bf16.mxu0 0
    %1130 = vmatpush2.bf16.msra.mxu0 0
    %1131 = vmatprep.subr.bf16.mxu0 0
    %1132 = vmatpush2.bf16.msra.mxu0 0
    %1133 = vmatprep.subr.bf16.mxu0 0
    %1134 = vmatpush2.bf16.msra.mxu0 0
    %1135 = vmatprep.subr.bf16.mxu0 0
    %1136 = vmatpush2.bf16.msra.mxu0 0
    %1137 = vmatprep.subr.bf16.mxu0 0
    %1138 = vmatpush2.bf16.msra.mxu0 0
    %1139 = vmatprep.mubr.bf16.mxu0 0
    %1140 = vmatmul.mubr.bf16.gmra.mxu0 %v1035
    %v1141 = vpop.f32.mrf.mxu0
    %v1142 = vadd.f32 %v1057, %v1141
    %v1143 = vpop.f32.mrf.mxu0
    %v1144 = vpop.f32.mrf.mxu0
    %v1145 = vpop.f32.mrf.mxu0
    %1146 = vdwg.mxu0
    %v1147 = vmul.f32 %v1142, 0.5
    %v1148 = vmul.f32 %v1142, 0.70710677
    %v1149 = verf.f32.pop %v1148
    %v1150 = vadd.f32 %v1149, 1.0
    %v1151 = vmul.f32 %v1147, %v1150
    %v1152 = vpack.c.bf16 %v1151, %v1151
    %v1153 = vld [vmem:[#allocation7] sm:$0xf]
    %v1154 = vld [vmem:[#allocation7 + $0x4] sm:$0xf]
    %v1155 = vld [vmem:[#allocation7 + $0x8] sm:$0xf]
    %v1156 = vld [vmem:[#allocation7 + $0xc] sm:$0xf]
    %v1157 = vld [vmem:[#allocation7 + $0x10] sm:$0xf]
    %v1158 = vld [vmem:[#allocation7 + $0x14] sm:$0xf]
    %v1159 = vld [vmem:[#allocation7 + $0x18] sm:$0xf]
    %v1160 = vld [vmem:[#allocation7 + $0x1c] sm:$0xf]
    %v1161 = vld [vmem:[#allocation7 + $0x20] sm:$0xf]
    %v1162 = vld [vmem:[#allocation7 + $0x24] sm:$0xf]
    %v1163 = vld [vmem:[#allocation7 + $0x28] sm:$0xf]
    %v1164 = vld [vmem:[#allocation7 + $0x2c] sm:$0xf]
    %v1165 = vld [vmem:[#allocation7 + $0x30] sm:$0xf]
    %v1166 = vld [vmem:[#allocation7 + $0x34] sm:$0xf]
    %v1167 = vld [vmem:[#allocation7 + $0x38] sm:$0xf]
    %v1168 = vld [vmem:[#allocation7 + $0x3c] sm:$0xf]
    %v1169 = vld [vmem:[%s10] sm:$0x1]
    %v1171 = vlaneseq
    %v1172 = vshrl.u32 %v1171, 7
    %v1173 = vsub.s32 0, %v1172
    %v1174 = vrot.slane %v1169, %v1173
    %v1192 = vunpack.c.l.b16 %v1153
    %v1193 = vunpack.c.l.b16 %v1154
    %v1194 = vunpack.c.l.b16 %v1155
    %v1195 = vunpack.c.l.b16 %v1156
    %v1196 = vunpack.c.l.b16 %v1157
    %v1197 = vunpack.c.l.b16 %v1158
    %v1198 = vunpack.c.l.b16 %v1159
    %v1199 = vunpack.c.l.b16 %v1160
    %v1200 = vunpack.c.l.b16 %v1161
    %v1201 = vunpack.c.l.b16 %v1162
    %v1202 = vunpack.c.l.b16 %v1163
    %v1203 = vunpack.c.l.b16 %v1164
    %v1204 = vunpack.c.l.b16 %v1165
    %v1205 = vunpack.c.l.b16 %v1166
    %v1206 = vunpack.c.l.b16 %v1167
    %v1207 = vunpack.c.l.b16 %v1168
    %v1208 = vpack.c.b16 %v1193, %v1192
    %v1209 = vpack.c.b16 %v1195, %v1194
    %v1210 = vpack.c.b16 %v1197, %v1196
    %v1211 = vpack.c.b16 %v1199, %v1198
    %v1212 = vpack.c.b16 %v1201, %v1200
    %v1213 = vpack.c.b16 %v1203, %v1202
    %v1214 = vpack.c.b16 %v1205, %v1204
    %v1215 = vpack.c.b16 %v1207, %v1206
    %1224 = vmatprep.subr.bf16.mxu0 0
    %1225 = vmatpush1.bf16.msra.mxu0 %v1215
    %1226 = vmatprep.subr.bf16.mxu0 0
    %1227 = vmatpush1.bf16.msra.mxu0 %v1214
    %1228 = vmatprep.subr.bf16.mxu0 0
    %1229 = vmatpush1.bf16.msra.mxu0 %v1213
    %1230 = vmatprep.subr.bf16.mxu0 0
    %1231 = vmatpush1.bf16.msra.mxu0 %v1212
    %1232 = vmatprep.subr.bf16.mxu0 0
    %1233 = vmatpush1.bf16.msra.mxu0 %v1211
    %1234 = vmatprep.subr.bf16.mxu0 0
    %1235 = vmatpush1.bf16.msra.mxu0 %v1210
    %1236 = vmatprep.subr.bf16.mxu0 0
    %1237 = vmatpush1.bf16.msra.mxu0 %v1209
    %1238 = vmatprep.subr.bf16.mxu0 0
    %1239 = vmatpush1.bf16.msra.mxu0 %v1208
    %1240 = vmatprep.subr.bf16.mxu0 0
    %1241 = vmatpush2.bf16.msra.mxu0 0
    %1242 = vmatprep.subr.bf16.mxu0 0
    %1243 = vmatpush2.bf16.msra.mxu0 0
    %1244 = vmatprep.subr.bf16.mxu0 0
    %1245 = vmatpush2.bf16.msra.mxu0 0
    %1246 = vmatprep.subr.bf16.mxu0 0
    %1247 = vmatpush2.bf16.msra.mxu0 0
    %1248 = vmatprep.subr.bf16.mxu0 0
    %1249 = vmatpush2.bf16.msra.mxu0 0
    %1250 = vmatprep.subr.bf16.mxu0 0
    %1251 = vmatpush2.bf16.msra.mxu0 0
    %1252 = vmatprep.subr.bf16.mxu0 0
    %1253 = vmatpush2.bf16.msra.mxu0 0
    %1254 = vmatprep.subr.bf16.mxu0 0
    %1255 = vmatpush2.bf16.msra.mxu0 0
    %1256 = vmatprep.mubr.bf16.mxu0 0
    %1257 = vmatmul.mubr.bf16.gmra.mxu0 %v1152
    %v1258 = vpop.f32.mrf.mxu0
    %v1259 = vadd.f32 %v1174, %v1258
    %v1260 = vpop.f32.mrf.mxu0
    %v1261 = vpop.f32.mrf.mxu0
    %v1262 = vpop.f32.mrf.mxu0
    %1263 = vdwg.mxu0
    %v1264 = vmul.f32 %v1259, 0.5
    %v1265 = vmul.f32 %v1259, 0.70710677
    %v1266 = verf.f32.pop %v1265
    %v1267 = vadd.f32 %v1266, 1.0
    %v1268 = vmul.f32 %v1264, %v1267
    %v1269 = vpack.c.bf16 %v1268, %v1268
    %v1270 = vld [vmem:[#allocation8] sm:$0xf]
    %v1271 = vld [vmem:[#allocation8 + $0x4] sm:$0xf]
    %v1272 = vld [vmem:[#allocation8 + $0x8] sm:$0xf]
    %v1273 = vld [vmem:[#allocation8 + $0xc] sm:$0xf]
    %v1274 = vld [vmem:[#allocation8 + $0x10] sm:$0xf]
    %v1275 = vld [vmem:[#allocation8 + $0x14] sm:$0xf]
    %v1276 = vld [vmem:[#allocation8 + $0x18] sm:$0xf]
    %v1277 = vld [vmem:[#allocation8 + $0x1c] sm:$0xf]
    %v1278 = vld [vmem:[#allocation8 + $0x20] sm:$0xf]
    %v1279 = vld [vmem:[#allocation8 + $0x24] sm:$0xf]
    %v1280 = vld [vmem:[#allocation8 + $0x28] sm:$0xf]
    %v1281 = vld [vmem:[#allocation8 + $0x2c] sm:$0xf]
    %v1282 = vld [vmem:[#allocation8 + $0x30] sm:$0xf]
    %v1283 = vld [vmem:[#allocation8 + $0x34] sm:$0xf]
    %v1284 = vld [vmem:[#allocation8 + $0x38] sm:$0xf]
    %v1285 = vld [vmem:[#allocation8 + $0x3c] sm:$0xf]
    %v1286 = vld [vmem:[%s12] sm:$0x1]
    %v1288 = vlaneseq
    %v1289 = vshrl.u32 %v1288, 7
    %v1290 = vsub.s32 0, %v1289
    %v1291 = vrot.slane %v1286, %v1290
    %v1309 = vunpack.c.l.b16 %v1270
    %v1310 = vunpack.c.l.b16 %v1271
    %v1311 = vunpack.c.l.b16 %v1272
    %v1312 = vunpack.c.l.b16 %v1273
    %v1313 = vunpack.c.l.b16 %v1274
    %v1314 = vunpack.c.l.b16 %v1275
    %v1315 = vunpack.c.l.b16 %v1276
    %v1316 = vunpack.c.l.b16 %v1277
    %v1317 = vunpack.c.l.b16 %v1278
    %v1318 = vunpack.c.l.b16 %v1279
    %v1319 = vunpack.c.l.b16 %v1280
    %v1320 = vunpack.c.l.b16 %v1281
    %v1321 = vunpack.c.l.b16 %v1282
    %v1322 = vunpack.c.l.b16 %v1283
    %v1323 = vunpack.c.l.b16 %v1284
    %v1324 = vunpack.c.l.b16 %v1285
    %v1325 = vpack.c.b16 %v1310, %v1309
    %v1326 = vpack.c.b16 %v1312, %v1311
    %v1327 = vpack.c.b16 %v1314, %v1313
    %v1328 = vpack.c.b16 %v1316, %v1315
    %v1329 = vpack.c.b16 %v1318, %v1317
    %v1330 = vpack.c.b16 %v1320, %v1319
    %v1331 = vpack.c.b16 %v1322, %v1321
    %v1332 = vpack.c.b16 %v1324, %v1323
    %1341 = vmatprep.subr.bf16.mxu0 0
    %1342 = vmatpush1.bf16.msra.mxu0 %v1332
    %1343 = vmatprep.subr.bf16.mxu0 0
    %1344 = vmatpush1.bf16.msra.mxu0 %v1331
    %1345 = vmatprep.subr.bf16.mxu0 0
    %1346 = vmatpush1.bf16.msra.mxu0 %v1330
    %1347 = vmatprep.subr.bf16.mxu0 0
    %1348 = vmatpush1.bf16.msra.mxu0 %v1329
    %1349 = vmatprep.subr.bf16.mxu0 0
    %1350 = vmatpush1.bf16.msra.mxu0 %v1328
    %1351 = vmatprep.subr.bf16.mxu0 0
    %1352 = vmatpush1.bf16.msra.mxu0 %v1327
    %1353 = vmatprep.subr.bf16.mxu0 0
    %1354 = vmatpush1.bf16.msra.mxu0 %v1326
    %1355 = vmatprep.subr.bf16.mxu0 0
    %1356 = vmatpush1.bf16.msra.mxu0 %v1325
    %1357 = vmatprep.subr.bf16.mxu0 0
    %1358 = vmatpush2.bf16.msra.mxu0 0
    %1359 = vmatprep.subr.bf16.mxu0 0
    %1360 = vmatpush2.bf16.msra.mxu0 0
    %1361 = vmatprep.subr.bf16.mxu0 0
    %1362 = vmatpush2.bf16.msra.mxu0 0
    %1363 = vmatprep.subr.bf16.mxu0 0
    %1364 = vmatpush2.bf16.msra.mxu0 0
    %1365 = vmatprep.subr.bf16.mxu0 0
    %1366 = vmatpush2.bf16.msra.mxu0 0
    %1367 = vmatprep.subr.bf16.mxu0 0
    %1368 = vmatpush2.bf16.msra.mxu0 0
    %1369 = vmatprep.subr.bf16.mxu0 0
    %1370 = vmatpush2.bf16.msra.mxu0 0
    %1371 = vmatprep.subr.bf16.mxu0 0
    %1372 = vmatpush2.bf16.msra.mxu0 0
    %1373 = vmatprep.mubr.bf16.mxu0 0
    %1374 = vmatmul.mubr.bf16.gmra.mxu0 %v1269
    %v1375 = vpop.f32.mrf.mxu0
    %v1376 = vadd.f32 %v1291, %v1375
    %v1377 = vpop.f32.mrf.mxu0
    %v1378 = vpop.f32.mrf.mxu0
    %v1379 = vpop.f32.mrf.mxu0
    %1380 = vdwg.mxu0
    %1381 = vst [vmem:[#allocation10] sm:$0xff] %v1376
    // Predicated region
    $region70: #{mlp_forward.1} parent=1 // pred_check
      _
    $region71: #{mlp_forward.1} parent=1 // pred_check_branch
      %1383 = sbr.rel (0) target = $region73
    $region72: #{mlp_forward.1} parent=1 // pred_region
      %s1385 = ssub.s32 128, 128
      %1386 = vsyncadd [#allocation4], %s1385
      %s1388 = sshll.u32 [#allocation10], 4
      %s1389 = int_to_ptr.vmem [resolvable:$true] %s1388
      %1391 = dma.vmem_to_hbm [thread:$0]  %s1389, 128, %s13, [#allocation4]
    $region73: #{mlp_forward.1} parent=1 // pred_fallthru
      _
    // Predicated region
    $region74: #{mlp_forward.1} parent=1 // pred_check
      _
    $region75: #{mlp_forward.1} parent=1 // pred_check_branch
      %1393 = sbr.rel (0) target = $region77
    $region76: #{mlp_forward.1} parent=1 // pred_region
      %1394 = dma.done [#allocation4], 128
    $region77: #{mlp_forward.1} parent=1 // pred_fallthru
      _
    %1395 = vsyncpa [#allocation3], 1
    %1396 = vsyncpa [#allocation6], 1
    %1397 = vsyncpa [#allocation9], 1
    %1398 = vsyncpa [#allocation4], 1

</llo_original>
